<compile_context>
chip_gen: v7x
topology: tpu7x:2x2x1
jax: 0.10.0
libtpu: 0.0.40
codegen_flags: <defaults>
</compile_context>

<pallas_src>
import functools

import jax
import jax.numpy as jnp
from jax.experimental import pallas as pl
from jax.experimental.pallas import tpu as pltpu


def _ce_partial_kernel(logits_ref, tgt_ref, out_ref, *, ignore_index, num_pixels):
    """Cross-entropy partial sums for one (image, pixel-tile) grid cell.

    logits_ref: (C, TILE_P) float  - classes on sublanes, pixels on lanes
    tgt_ref:    (1, TILE_P) int32  - target class id per pixel
    out_ref:    (1, 128)    f32    - lane-dense partial sum for this block
    """
    x = logits_ref[...].astype(jnp.float32)               # (C, TILE_P)
    t = tgt_ref[...]                                       # (1, TILE_P)
    c, tp = x.shape

    # Numerically stable log-sum-exp over the class (sublane) axis, per lane.
    m = jnp.max(x, axis=0, keepdims=True)                  # (1, TILE_P)
    lse = m + jnp.log(jnp.sum(jnp.exp(x - m), axis=0, keepdims=True))

    # Target-class logit: fused mask-multiply accumulate along the class axis
    # (single cmp + mul per element instead of a materialized one-hot select).
    row = jax.lax.broadcasted_iota(jnp.int32, (c, tp), 0)
    tgt_logit = jnp.sum(x * (row == t).astype(jnp.float32), axis=0, keepdims=True)

    # Validity mask: inside the real pixel range (handles the ragged last tile
    # without any wrapper-side jnp.pad of the logits) and not ignore_index.
    lane = jax.lax.broadcasted_iota(jnp.int32, (1, tp), 1)
    pix = pl.program_id(1) * tp + lane
    valid = (pix < num_pixels) & (t != ignore_index)
    per_pixel = jnp.where(valid, lse - tgt_logit, 0.0)      # (1, TILE_P)

    # Fold the TILE_P lanes into one lane-dense (1, 128) partial using a
    # pairwise tree of VPU adds: no serial dependency chain, no XLU reduce,
    # no scalar read-modify-write.
    chunks = [per_pixel[:, k * 128:(k + 1) * 128] for k in range(tp // 128)]
    while len(chunks) > 1:
        nxt = [chunks[i] + chunks[i + 1] for i in range(0, len(chunks) - 1, 2)]
        if len(chunks) % 2:
            nxt.append(chunks[-1])
        chunks = nxt
    out_ref[...] = chunks[0]


def criterion2_loss(preds, target, ignore_index=255):
    """preds: (N, C, H, W) float; target: (N, H, W) int. Returns scalar f32."""
    n, c, h, w = preds.shape
    p = h * w

    # Free views of the native NCHW layout (no HBM transpose, no jnp.pad pass).
    logits = preds.reshape(n, c, p)
    tgt = target.astype(jnp.int32).reshape(n, 1, p)

    itemsize = jnp.dtype(preds.dtype).itemsize
    try:
        vmem_cap = int(pltpu.get_tpu_info().vmem_capacity_bytes)
    except Exception:
        vmem_cap = 64 << 20                      # v7x per-core VMEM (smallest gen)
    vmem_cap = max(vmem_cap, 32 << 20)

    # Pixel tile sized from the real VMEM budget: 2x (double-buffered logits
    # block) + ~6x f32 in-kernel temporaries must fit with headroom.
    usable = (min(vmem_cap, 128 << 20) * 3) // 4
    block_budget = max(1 << 20, usable // 8)      # raw logits-block byte budget
    tile_p = block_budget // max(1, c * itemsize)
    tile_p = min(tile_p, 64 * 1024)               # bound the unrolled lane fold
    tile_p = max(128, (tile_p // 128) * 128)

    p_ceil = pl.cdiv(p, 128) * 128
    tile_p = min(tile_p, p_ceil)
    # Keep >= 2 grid cells so both v7x TensorCores get work under the
    # ("parallel", "parallel") dimension semantics.
    if n * pl.cdiv(p, tile_p) < 2 and p_ceil >= 256:
        tile_p = pl.cdiv(p_ceil // 2, 128) * 128
    gp = pl.cdiv(p, tile_p)

    kernel = functools.partial(_ce_partial_kernel,
                               ignore_index=ignore_index, num_pixels=p)

    cost = pl.CostEstimate(
        flops=int(n * p * (4 * c + 6)),
        transcendentals=int(n * p * (c + 1)),
        bytes_accessed=int(logits.size * itemsize + tgt.size * 4
                           + n * gp * 128 * 4),
    )

    # Raise the scoped VMEM limit above the 16/32 MiB defaults (headroom kept
    # below physical capacity, which is only 64 MiB per core on v7x).
    vmem_limit = int(max(32 << 20, min(vmem_cap - (8 << 20), 100 << 20)))

    partials = pl.pallas_call(
        kernel,
        out_shape=jax.ShapeDtypeStruct((n, gp, 1, 128), jnp.float32),
        grid=(n, gp),
        in_specs=[
            # logits: (N, C, P) tiled as (1, C, TILE_P), leading dim squeezed.
            # (On v5e, pipeline_mode=pl.Buffered(3) here can help if the DMA is
            #  still exposed; with these tile sizes double buffering suffices.)
            pl.BlockSpec((None, c, tile_p), lambda i, j: (i, 0, j)),
            # targets: (N, 1, P) tiled as (1, 1, TILE_P), lane-dense.
            pl.BlockSpec((None, 1, tile_p), lambda i, j: (i, 0, j)),
        ],
        out_specs=pl.BlockSpec((None, None, 1, 128), lambda i, j: (i, j, 0, 0)),
        compiler_params=pltpu.CompilerParams(
            dimension_semantics=("parallel", "parallel"),
            vmem_limit_bytes=vmem_limit,
        ),
        cost_estimate=cost,
    )(logits, tgt)

    # Tiny final reduction of the per-block lane-dense partials in JAX.
    return jnp.sum(partials)


def _reference_loss(preds, target, ignore_index=255):
    """Pure-JAX reference (matches torch CrossEntropyLoss, reduction='sum')."""
    n, c, h, w = preds.shape
    logits = jnp.transpose(preds, (0, 2, 3, 1)).reshape(-1, c).astype(jnp.float32)
    tgt = target.astype(jnp.int32).reshape(-1)
    lse = jax.scipy.special.logsumexp(logits, axis=-1)
    valid = tgt != ignore_index
    safe_t = jnp.where(valid, tgt, 0)
    tgt_logit = jnp.take_along_axis(logits, safe_t[:, None], axis=-1)[:, 0]
    return jnp.sum(jnp.where(valid, lse - tgt_logit, 0.0))


if __name__ == "__main__":
    key = jax.random.PRNGKey(0)
    k1, k2, k3, k4, k5 = jax.random.split(key, 5)

    ignore_index = 255

    # Case 1: small canonical shape, with some ignored pixels.
    N, C, H, W = 2, 4, 16, 16
    preds = jax.random.normal(k1, (N, C, H, W), dtype=jnp.float32)
    target = jax.random.randint(k2, (N, H, W), 0, C, dtype=jnp.int32)
    ignore_mask = jax.random.bernoulli(k3, 0.1, (N, H, W))
    target = jnp.where(ignore_mask, ignore_index, target)

    loss = jax.block_until_ready(criterion2_loss(preds, target, ignore_index))
    ref = _reference_loss(preds, target, ignore_index)
    assert jnp.allclose(loss, ref, rtol=1e-4, atol=1e-4), (loss, ref)

    # Case 2: single image, more pixels -> exercises the >=2-grid-cell split,
    # the multi-chunk lane tree-fold, and multi-block accumulation.
    N2, C2, H2, W2 = 1, 8, 32, 64
    preds2 = jax.random.normal(k4, (N2, C2, H2, W2), dtype=jnp.float32)
    target2 = jax.random.randint(k5, (N2, H2, W2), 0, C2, dtype=jnp.int32)

    loss2 = jax.block_until_ready(criterion2_loss(preds2, target2, ignore_index))
    ref2 = _reference_loss(preds2, target2, ignore_index)
    assert jnp.allclose(loss2, ref2, rtol=1e-4, atol=1e-4), (loss2, ref2)

    print("KERNEL_OK")
</pallas_src>

<mosaic_0001>
module attributes {stable_mosaic.version = 11 : i64} {
  func.func @_ce_partial_kernel(%arg0: i32, %arg1: i32, %arg2: memref<1x4x256xf32, #tpu.memory_space<vmem>>, %arg3: memref<1x1x256xi32, #tpu.memory_space<vmem>>, %arg4: memref<1x1x1x128xf32, #tpu.memory_space<vmem>>) attributes {dimension_semantics = [#tpu.dimension_semantics<parallel>, #tpu.dimension_semantics<parallel>], iteration_bounds = array<i64: 2, 1>, scalar_prefetch = 0 : i64, scratch_operands = 0 : i64, tpu.core_type = #tpu.core_type<tc>, window_params = [{transform_indices = @transform_0, window_bounds = array<i64: 1, 4, 256>}, {transform_indices = @transform_1, window_bounds = array<i64: 1, 1, 256>}, {transform_indices = @transform_2, window_bounds = array<i64: 1, 1, 1, 128>}]} {
    %c0 = arith.constant 0 : index
    %c0_0 = arith.constant 0 : index
    %c0_1 = arith.constant 0 : index
    %0 = vector.load %arg2[%c0, %c0_0, %c0_1] : memref<1x4x256xf32, #tpu.memory_space<vmem>>, vector<1x4x256xf32>
    %1 = vector.shape_cast %0 : vector<1x4x256xf32> to vector<4x256xf32>
    %c0_2 = arith.constant 0 : index
    %c0_3 = arith.constant 0 : index
    %c0_4 = arith.constant 0 : index
    %2 = vector.load %arg3[%c0_2, %c0_3, %c0_4] : memref<1x1x256xi32, #tpu.memory_space<vmem>>, vector<1x1x256xi32>
    %3 = vector.shape_cast %2 : vector<1x1x256xi32> to vector<1x256xi32>
    %cst = arith.constant dense<0xFF800000> : vector<256xf32>
    %4 = vector.multi_reduction <maximumf>, %1, %cst [0] : vector<4x256xf32> to vector<256xf32>
    %5 = vector.shape_cast %4 : vector<256xf32> to vector<1x256xf32>
    %6 = vector.broadcast %5 : vector<1x256xf32> to vector<4x256xf32>
    %7 = arith.subf %1, %6 : vector<4x256xf32>
    %8 = math.exp %7 : vector<4x256xf32>
    %cst_5 = arith.constant dense<0.000000e+00> : vector<256xf32>
    %9 = vector.multi_reduction <add>, %8, %cst_5 [0] : vector<4x256xf32> to vector<256xf32>
    %10 = vector.shape_cast %9 : vector<256xf32> to vector<1x256xf32>
    %11 = math.log %10 : vector<1x256xf32>
    %12 = arith.addf %5, %11 : vector<1x256xf32>
    %13 = tpu.iota {dimensions = array<i32: 0>} : vector<4x256xi32>
    %14 = vector.broadcast %3 : vector<1x256xi32> to vector<4x256xi32>
    %15 = arith.cmpi eq, %13, %14 : vector<4x256xi32>
    %16 = arith.extui %15 : vector<4x256xi1> to vector<4x256xi32>
    %17 = arith.sitofp %16 : vector<4x256xi32> to vector<4x256xf32>
    %18 = arith.mulf %1, %17 : vector<4x256xf32>
    %cst_6 = arith.constant dense<0.000000e+00> : vector<256xf32>
    %19 = vector.multi_reduction <add>, %18, %cst_6 [0] : vector<4x256xf32> to vector<256xf32>
    %20 = vector.shape_cast %19 : vector<256xf32> to vector<1x256xf32>
    %21 = tpu.iota {dimensions = array<i32: 1>} : vector<1x256xi32>
    %c256_i32 = arith.constant 256 : i32
    %22 = arith.muli %arg1, %c256_i32 : i32
    %23 = vector.broadcast %22 : i32 to vector<1x256xi32>
    %24 = arith.addi %23, %21 : vector<1x256xi32>
    %c256_i32_7 = arith.constant 256 : i32
    %25 = vector.broadcast %c256_i32_7 : i32 to vector<1x256xi32>
    %26 = arith.cmpi slt, %24, %25 : vector<1x256xi32>
    %c255_i32 = arith.constant 255 : i32
    %27 = vector.broadcast %c255_i32 : i32 to vector<1x256xi32>
    %28 = arith.cmpi ne, %3, %27 : vector<1x256xi32>
    %29 = arith.andi %26, %28 : vector<1x256xi1>
    %30 = arith.subf %12, %20 : vector<1x256xf32>
    %cst_8 = arith.constant 0.000000e+00 : f32
    %31 = vector.broadcast %cst_8 : f32 to vector<1x256xf32>
    %32 = arith.select %29, %30, %31 : vector<1x256xi1>, vector<1x256xf32>
    %33 = vector.extract_strided_slice %32 {offsets = [0, 0], sizes = [1, 128], strides = [1, 1]} : vector<1x256xf32> to vector<1x128xf32>
    %34 = vector.extract_strided_slice %32 {offsets = [0, 128], sizes = [1, 128], strides = [1, 1]} : vector<1x256xf32> to vector<1x128xf32>
    %35 = arith.addf %33, %34 : vector<1x128xf32>
    %c0_9 = arith.constant 0 : index
    %c0_10 = arith.constant 0 : index
    %c0_11 = arith.constant 0 : index
    %c0_12 = arith.constant 0 : index
    %36 = vector.load %arg4[%c0_9, %c0_10, %c0_11, %c0_12] : memref<1x1x1x128xf32, #tpu.memory_space<vmem>>, vector<1x1x1x128xf32>
    %37 = vector.shape_cast %36 : vector<1x1x1x128xf32> to vector<1x128xf32>
    %38 = vector.shape_cast %35 : vector<1x128xf32> to vector<1x1x1x128xf32>
    tpu.vector_store %arg4[%c0_9, %c0_10, %c0_11, %c0_12], %38 {strides = array<i32>} : memref<1x1x1x128xf32, #tpu.memory_space<vmem>>, vector<1x1x1x128xf32>,
    return
  }
  func.func @transform_0(%arg0: i32, %arg1: i32) -> (i32, i32, i32) {
    %c0_i32 = arith.constant 0 : i32
    %c0_i32_0 = arith.constant 0 : i32
    return %arg0, %c0_i32, %arg1 : i32, i32, i32
  }
  func.func @transform_1(%arg0: i32, %arg1: i32) -> (i32, i32, i32) {
    %c0_i32 = arith.constant 0 : i32
    %c0_i32_0 = arith.constant 0 : i32
    return %arg0, %c0_i32, %arg1 : i32, i32, i32
  }
  func.func @transform_2(%arg0: i32, %arg1: i32) -> (i32, i32, i32, i32) {
    %c0_i32 = arith.constant 0 : i32
    %c0_i32_0 = arith.constant 0 : i32
    %c0_i32_1 = arith.constant 0 : i32
    return %arg0, %arg1, %c0_i32, %c0_i32_0 : i32, i32, i32, i32
  }
}

</mosaic_0001>

<llo_original>
// kernel: tpu_custom_call.1
$region0: #{tpu_custom_call.1}
  #allocation0 [shape = 'u32[]', space=smem, size = 0x4, offset = 0x4, fixed_abs, tag = 'smem constant byte address 0x4 - core index']
  #allocation1 [shape = 'u32[144,128]{1,0:T(1,128)}', space=vmem, size = 0x12000, scoped, tag = 'internal scratch']
  %s0 = inlined_call_operand.hbm [shape: f32[2,4,256], index: 0, kind: input, shape index: {}]
  %s1 = inlined_call_operand.hbm [shape: s32[2,1,256], index: 1, kind: input, shape index: {}]
  %s2 = inlined_call_operand.hbm [shape: f32[2,1,1,128], index: 2, kind: output, shape index: {}]
  %s3 = sld [smem:[#allocation0]]
  $region49: #{tpu_custom_call.1} parent=0
    _
  %s5 = ssub.s32 1, %s3
  %s6 = scalar_select 0, %s5, %s3
  $region1: #{tpu_custom_call.1} parent=0
    #allocation2 [shape = 'u8[8192]{0}', space=vmem, size = 0x2000, scoped, tag = 'input window, operand 0']
    #allocation3 [shape = 's32[2]{0}', space=sflag, size = 0x8, scoped, tag = 'scoped memory for tpu_custom_call.1']
    #allocation4 [shape = 's32[2]{0}', space=sflag, size = 0x8, scoped, tag = 'scoped memory for tpu_custom_call.1']
    #allocation5 [shape = 'u8[2048]{0}', space=vmem, size = 0x800, scoped, tag = 'input window, operand 1']
    #allocation6 [shape = 's32[2]{0}', space=sflag, size = 0x8, scoped, tag = 'scoped memory for tpu_custom_call.1']
    #allocation7 [shape = 'u8[1024]{0}', space=vmem, size = 0x400, scoped, tag = 'output window, operand 0']
    %7 = vsyncpa [#allocation3], 0
    %s8 = scalar_lea.sflag [#allocation3], 1
    %9 = vsyncpa %s8, 0
    %10 = vsyncpa [#allocation6], 0
    %s11 = scalar_lea.sflag [#allocation6], 1
    %12 = vsyncpa %s11, 0
    %13 = vsyncpa [#allocation4], 0
    %s14 = scalar_lea.sflag [#allocation4], 1
    %15 = vsyncpa %s14, 0
    loop: start=0, step=1, limit=4
    $region2: #{tpu_custom_call.1} parent=1 // loop_pre_header
      _
    $region3: #{tpu_custom_call.1} parent=1 // loop_header
      %s17 = sphi 0, %s21
      %p18 = scmp.ge.s32.totalorder %s17, 4
      %s24 = sphi 0, %s36
      %s25 = sphi 0, %s32
      %s26 = sphi 0, %s24
      %s27 = sphi 0, %s25
      %s28 = sphi 0, %s26
      %s29 = sphi 0, %s27
      %s41 = sphi 0, %s43
      %s44 = sphi 0, %s41
      %s45 = sphi 0, %s44
      %s61 = sphi 0, %s45
      %s69 = sphi 0, %s71
      %s72 = sphi 0, %s69
      %s73 = sphi 0, %s72
      %s89 = sphi 0, %s73
      %s97 = sphi 0, %s99
      %s100 = sphi 0, %s97
      %s101 = sphi 0, %s100
      %s117 = sphi 0, %s101
    $region4: #{tpu_custom_call.1} parent=1 // loop_header_branch
      %20 = sbr.rel (%p18) target = $region8
    $region5: #{tpu_custom_call.1} parent=1 // loop_body
      %s22 = ssub.s32 %s17, 1
      %s23 = ssub.s32 %s17, 2
      %s30 = sadd.s32 1, %s25
      %p31 = scmp.ge.s32.totalorder %s30, 1
      %s32 = scalar_select %p31, 0, %s30
      %s33 = sadd.s32 1, %s24
      %s34 = scalar_select %p31, %s33, %s24
      %p35 = scmp.ge.s32.totalorder %s34, 2
      %s36 = scalar_select %p35, 0, %s34
      %s37 = ssub.s32 %s24, %s36
      %s38 = ssub.s32 %s25, %s32
      %s39 = sor.u32 %s37, %s38
      %p40 = scmp.eq.s32.totalorder %s39, 0
      %s42 = sadd.s32 %s41, 1
      %s43 = scalar_select %p40, %s41, %s42
      %p46 = pneg %p40
      %p47 = scmp.eq.s32.totalorder %s17, 1
      %p48 = por %p46, %p47
      %p49 = scmp.ne.s32.totalorder %s41, %s44
      %p50 = scmp.eq.s32.totalorder %s17, 0
      %p51 = por %p49, %p50
      %p52 = scmp.ne.s32.totalorder %s41, %s44
      %p53 = scmp.eq.s32.totalorder %s22, 1
      %p54 = por %p52, %p53
      %p55 = scmp.ne.s32.totalorder %s44, %s45
      %p56 = scmp.eq.s32.totalorder %s22, 0
      %p57 = por %p55, %p56
      %p58 = scmp.ne.s32.totalorder %s44, %s45
      %p59 = scmp.eq.s32.totalorder %s23, 1
      %p60 = por %p58, %p59
      %p62 = scmp.ne.s32.totalorder %s45, %s61
      %p63 = scmp.eq.s32.totalorder %s23, 0
      %p64 = por %p62, %p63
      %s65 = ssub.s32 %s24, %s36
      %s66 = ssub.s32 %s25, %s32
      %s67 = sor.u32 %s65, %s66
      %p68 = scmp.eq.s32.totalorder %s67, 0
      %s70 = sadd.s32 %s69, 1
      %s71 = scalar_select %p68, %s69, %s70
      %p74 = pneg %p68
      %p75 = scmp.eq.s32.totalorder %s17, 1
      %p76 = por %p74, %p75
      %p77 = scmp.ne.s32.totalorder %s69, %s72
      %p78 = scmp.eq.s32.totalorder %s17, 0
      %p79 = por %p77, %p78
      %p80 = scmp.ne.s32.totalorder %s69, %s72
      %p81 = scmp.eq.s32.totalorder %s22, 1
      %p82 = por %p80, %p81
      %p83 = scmp.ne.s32.totalorder %s72, %s73
      %p84 = scmp.eq.s32.totalorder %s22, 0
      %p85 = por %p83, %p84
      %p86 = scmp.ne.s32.totalorder %s72, %s73
      %p87 = scmp.eq.s32.totalorder %s23, 1
      %p88 = por %p86, %p87
      %p90 = scmp.ne.s32.totalorder %s73, %s89
      %p91 = scmp.eq.s32.totalorder %s23, 0
      %p92 = por %p90, %p91
      %s93 = ssub.s32 %s24, %s36
      %s94 = ssub.s32 %s25, %s32
      %s95 = sor.u32 %s93, %s94
      %p96 = scmp.eq.s32.totalorder %s95, 0
      %s98 = sadd.s32 %s97, 1
      %s99 = scalar_select %p96, %s97, %s98
      %p102 = pneg %p96
      %p103 = scmp.eq.s32.totalorder %s17, 1
      %p104 = por %p102, %p103
      %p105 = scmp.ne.s32.totalorder %s97, %s100
      %p106 = scmp.eq.s32.totalorder %s17, 0
      %p107 = por %p105, %p106
      %p108 = scmp.ne.s32.totalorder %s97, %s100
      %p109 = scmp.eq.s32.totalorder %s22, 1
      %p110 = por %p108, %p109
      %p111 = scmp.ne.s32.totalorder %s100, %s101
      %p112 = scmp.eq.s32.totalorder %s22, 0
      %p113 = por %p111, %p112
      %p114 = scmp.ne.s32.totalorder %s100, %s101
      %p115 = scmp.eq.s32.totalorder %s23, 1
      %p116 = por %p114, %p115
      %p118 = scmp.ne.s32.totalorder %s101, %s117
      %p119 = scmp.eq.s32.totalorder %s23, 0
      %p120 = por %p118, %p119
      %p121 = scmp.le.s32.totalorder 1, %s17
      %p122 = scmp.lt.s32.totalorder %s17, 3
      %p123 = pnand %p121, %p122
      %p124 = pneg %p123
      // Predicated region
      $region9: #{tpu_custom_call.1} parent=5 // pred_check
        _
      $region10: #{tpu_custom_call.1} parent=5 // pred_check_branch
        %126 = sbr.rel (%p123) target = $region12
      $region11: #{tpu_custom_call.1} parent=5 // pred_region
        %s127 = ssub.s32 %s17, 1
      $region12: #{tpu_custom_call.1} parent=5 // pred_fallthru
        _
      %p128 = scmp.lt.s32.totalorder %s17, 2
      // Predicated region
      $region13: #{tpu_custom_call.1} parent=5 // pred_check
        %p129 = pneg %p128
      $region14: #{tpu_custom_call.1} parent=5 // pred_check_branch
        %131 = sbr.rel (%p129) target = $region16
      $region15: #{tpu_custom_call.1} parent=5 // pred_region
        // Predicated region
        $region17: #{tpu_custom_call.1} parent=15 // pred_check
          %p132 = pneg %p51
        $region18: #{tpu_custom_call.1} parent=15 // pred_check_branch
          %134 = sbr.rel (%p132) target = $region20
        $region19: #{tpu_custom_call.1} parent=15 // pred_region
          %s135 = sand.u32 %s41, 1
          %s136 = scalar_lea.sflag [#allocation3], %s135
          %s137 = sand.u32 %s41, 1
          %s138 = smul.addr %s137, 8
          %s139 = scalar_lea.vmem [#allocation2], %s138
          %s140 = smul.u32 2, %s25
          %s142 = ssub.s32 128, 128
          %143 = vsyncadd %s136, %s142
          %s144 = smul.addr %s24, 2
          %s145 = sadd.s32 %s140, %s144
          %s146 = smul.addr %s145, 64
          %s147 = scalar_lea.hbm %s0, %s146
          %s149 = sshll.u32 %s139, 4
          %s150 = int_to_ptr.vmem [resolvable:$true] %s149
          %152 = dma.hbm_to_vmem [thread:$0]  %s147, 128, %s150, %s136
        $region20: #{tpu_custom_call.1} parent=15 // pred_fallthru
          _
        // Predicated region
        $region21: #{tpu_custom_call.1} parent=15 // pred_check
          %p153 = pneg %p79
        $region22: #{tpu_custom_call.1} parent=15 // pred_check_branch
          %155 = sbr.rel (%p153) target = $region24
        $region23: #{tpu_custom_call.1} parent=15 // pred_region
          %s156 = sand.u32 %s69, 1
          %s157 = scalar_lea.sflag [#allocation6], %s156
          %s158 = sand.u32 %s69, 1
          %s159 = smul.addr %s158, 2
          %s160 = scalar_lea.vmem [#allocation5], %s159
          %s161 = smul.u32 2, %s25
          %s163 = ssub.s32 32, 32
          %164 = vsyncadd %s157, %s163
          %s165 = smul.addr %s24, 2
          %s166 = sadd.s32 %s161, %s165
          %s167 = smul.addr %s166, 16
          %s168 = scalar_lea.hbm %s1, %s167
          %s170 = sshll.u32 %s160, 4
          %s171 = int_to_ptr.vmem [resolvable:$true] %s170
          %173 = dma.hbm_to_vmem [thread:$0]  %s168, 32, %s171, %s157
        $region24: #{tpu_custom_call.1} parent=15 // pred_fallthru
          _
      $region16: #{tpu_custom_call.1} parent=5 // pred_fallthru
        _
      %p174 = scmp.le.s32.totalorder 1, %s17
      %p175 = scmp.lt.s32.totalorder %s17, 3
      %p176 = pnand %p174, %p175
      %p177 = pneg %p176
      // Predicated region
      $region25: #{tpu_custom_call.1} parent=5 // pred_check
        _
      $region26: #{tpu_custom_call.1} parent=5 // pred_check_branch
        %179 = sbr.rel (%p176) target = $region28
      $region27: #{tpu_custom_call.1} parent=5 // pred_region
        %s180 = ssub.s32 %s17, 1
        %s181 = sand.u32 %s44, 1
        %s182 = scalar_lea.sflag [#allocation3], %s181
        %s183 = sand.u32 %s44, 1
        %s184 = smul.addr %s183, 8
        %s185 = scalar_lea.vmem [#allocation2], %s184
        // Predicated region
        $region29: #{tpu_custom_call.1} parent=27 // pred_check
          %p186 = pneg %p57
        $region30: #{tpu_custom_call.1} parent=27 // pred_check_branch
          %188 = sbr.rel (%p186) target = $region32
        $region31: #{tpu_custom_call.1} parent=27 // pred_region
          %189 = dma.done %s182, 128
        $region32: #{tpu_custom_call.1} parent=27 // pred_fallthru
          _
        %s190 = sand.u32 %s72, 1
        %s191 = scalar_lea.sflag [#allocation6], %s190
        %s192 = sand.u32 %s72, 1
        %s193 = smul.addr %s192, 2
        %s194 = scalar_lea.vmem [#allocation5], %s193
        // Predicated region
        $region33: #{tpu_custom_call.1} parent=27 // pred_check
          %p195 = pneg %p85
        $region34: #{tpu_custom_call.1} parent=27 // pred_check_branch
          %197 = sbr.rel (%p195) target = $region36
        $region35: #{tpu_custom_call.1} parent=27 // pred_region
          %198 = dma.done %s191, 32
        $region36: #{tpu_custom_call.1} parent=27 // pred_fallthru
          _
        %s199 = sand.u32 %s44, 1
        %s200 = scalar_lea.sflag [#allocation3], %s199
        %s201 = sand.u32 %s44, 1
        %s202 = smul.addr %s201, 8
        %s203 = scalar_lea.vmem [#allocation2], %s202
        %p204 = pneg %p57
        %p205 = pneg %p54
        %s206 = sand.u32 %s72, 1
        %s207 = scalar_lea.sflag [#allocation6], %s206
        %s208 = sand.u32 %s72, 1
        %s209 = smul.addr %s208, 2
        %s210 = scalar_lea.vmem [#allocation5], %s209
        %p211 = pneg %p85
        %p212 = pneg %p82
        %p213 = pneg %p113
        %p214 = pneg %p110
        %s215 = sand.u32 %s100, 1
        %s216 = scalar_lea.sflag [#allocation4], %s215
        %s217 = sand.u32 %s100, 1
        %s218 = scalar_lea.vmem [#allocation7], %s217
        %s219 = smul.u32 2, %s27
        %s220 = smul.u32 2, %s27
        %v221 = vld [vmem:[%s185] sm:$0xff]
        %v222 = vld [vmem:[%s194] sm:$0x3]
        %v224 = vcombine.high %v221, %v221
        %vm226 = vcmask 1043456
        %v227 = vsel %vm226, %v221, -inf
        %v228 = vrot.slane %v227, 4
        %v229 = vmax.f32 %v227, %v228
        %v230 = vrot.slane %v229, 2
        %v231 = vmax.f32 %v229, %v230
        %v232 = vrot.slane %v231, 1
        %v233 = vmax.f32 %v231, %v232
        %v234 = vsel %vm226, %v224, -inf
        %v235 = vrot.slane %v234, 4
        %v236 = vmax.f32 %v234, %v235
        %v237 = vrot.slane %v236, 2
        %v238 = vmax.f32 %v236, %v237
        %v239 = vrot.slane %v238, 1
        %v240 = vmax.f32 %v238, %v239
        %v243 = vcombine.low %v233, %v240
        %v245 = vsub.f32 %v221, %v243
        %v246 = vmul.f32 %v245, 1.442695
        %v247 = vpow.pop %v246
        %v249 = vcombine.high %v247, %v247
        %v251 = vsel %vm226, %v247, 0.0
        %v252 = vrot.slane %v251, 4
        %v253 = vadd.f32 %v251, %v252
        %v254 = vrot.slane %v253, 2
        %v255 = vadd.f32 %v253, %v254
        %v256 = vrot.slane %v255, 1
        %v257 = vadd.f32 %v255, %v256
        %v258 = vsel %vm226, %v249, 0.0
        %v259 = vrot.slane %v258, 4
        %v260 = vadd.f32 %v258, %v259
        %v261 = vrot.slane %v260, 2
        %v262 = vadd.f32 %v260, %v261
        %v263 = vrot.slane %v262, 1
        %v264 = vadd.f32 %v262, %v263
        %v265 = vlog2.pop %v257
        %v266 = vmul.f32 %v265, 0.6931472
        %v267 = vlog2.pop %v264
        %v268 = vmul.f32 %v267, 0.6931472
        %v269 = vadd.f32 %v233, %v266
        %v270 = vadd.f32 %v240, %v268
        %v271 = vlaneseq
        %v272 = vshrl.u32 %v271, 7
        %v273 = vlaneseq
        %v274 = vshrl.u32 %v273, 7
        %v275 = vsub.s32 0, %v274
        %v276 = vrot.slane %v222, %v275
        %v277 = vlaneseq
        %v278 = vshrl.u32 %v277, 7
        %v279 = vsub.s32 1, %v278
        %v280 = vrot.slane %v222, %v279
        %vm281 = vcmp.eq.s32.totalorder %v272, %v276
        %vm282 = vcmp.eq.s32.totalorder %v272, %v280
        %v283 = vsel %vm281, 1, 0
        %v284 = vsel %vm282, 1, 0
        %v285 = vcvt.s32.f32 %v283
        %v286 = vcvt.s32.f32 %v284
        %v289 = vcombine.low %v285, %v286
        %v291 = vmul.f32 %v221, %v289
        %v293 = vcombine.high %v291, %v291
        %v295 = vsel %vm226, %v291, 0.0
        %v296 = vrot.slane %v295, 4
        %v297 = vadd.f32 %v295, %v296
        %v298 = vrot.slane %v297, 2
        %v299 = vadd.f32 %v297, %v298
        %v300 = vrot.slane %v299, 1
        %v301 = vadd.f32 %v299, %v300
        %v302 = vsel %vm226, %v293, 0.0
        %v303 = vrot.slane %v302, 4
        %v304 = vadd.f32 %v302, %v303
        %v305 = vrot.slane %v304, 2
        %v306 = vadd.f32 %v304, %v305
        %v307 = vrot.slane %v306, 1
        %v308 = vadd.f32 %v306, %v307
        %v309 = vlaneseq
        %v310 = vand.u32 %v309, 127
        %v311 = vadd.s32 %v310, 128
        %s312 = smul.u32 %s27, 256
        %v313 = vstv %s312
        %v314 = vadd.s32 %v313, %v310
        %v315 = vadd.s32 %v313, %v311
        %vm316 = vcmp.lt.s32.totalorder %v314, 256
        %vm317 = vcmp.lt.s32.totalorder %v315, 256
        %vm318 = vcmp.ne.s32.totalorder %v222, 255
        %v319 = vsel %vm318, 1, 0
        %v320 = vlaneseq
        %v321 = vshrl.u32 %v320, 7
        %v322 = vsub.s32 0, %v321
        %v323 = vrot.slane %v319, %v322
        %v324 = vlaneseq
        %v325 = vshrl.u32 %v324, 7
        %v326 = vsub.s32 1, %v325
        %v327 = vrot.slane %v319, %v326
        %vm328 = vcmp.ne.s32.totalorder %v323, 0
        %vm329 = vcmp.ne.s32.totalorder %v327, 0
        %vm330 = vmand %vm316, %vm328
        %vm331 = vmand %vm317, %vm329
        %v332 = vsub.f32 %v269, %v301
        %v333 = vsub.f32 %v270, %v308
        %v334 = vsel %vm330, %v332, 0.0
        %v335 = vsel %vm331, %v333, 0.0
        %v336 = vadd.f32 %v334, %v335
        %337 = vst [vmem:[%s218] sm:$0x1] %v336
        %s338 = sand.u32 %s100, 1
        %s339 = scalar_lea.sflag [#allocation4], %s338
        %s340 = sand.u32 %s100, 1
        %s341 = scalar_lea.vmem [#allocation7], %s340
        // Predicated region
        $region37: #{tpu_custom_call.1} parent=27 // pred_check
          %p342 = pneg %p110
        $region38: #{tpu_custom_call.1} parent=27 // pred_check_branch
          %344 = sbr.rel (%p342) target = $region40
        $region39: #{tpu_custom_call.1} parent=27 // pred_region
          %s346 = ssub.s32 16, 16
          %347 = vsyncadd %s339, %s346
          %s348 = sadd.s32 %s27, %s26
          %s349 = smul.addr %s348, 16
          %s350 = scalar_lea.hbm %s2, %s349
          %s352 = sshll.u32 %s341, 4
          %s353 = int_to_ptr.vmem [resolvable:$true] %s352
          %355 = dma.vmem_to_hbm [thread:$0]  %s353, 16, %s350, %s339
        $region40: #{tpu_custom_call.1} parent=27 // pred_fallthru
          _
      $region28: #{tpu_custom_call.1} parent=5 // pred_fallthru
        _
      %p356 = scmp.le.s32.totalorder 2, %s17
      // Predicated region
      $region41: #{tpu_custom_call.1} parent=5 // pred_check
        %p357 = pneg %p356
      $region42: #{tpu_custom_call.1} parent=5 // pred_check_branch
        %359 = sbr.rel (%p357) target = $region44
      $region43: #{tpu_custom_call.1} parent=5 // pred_region
        %s360 = ssub.s32 %s17, 2
        // Predicated region
        $region45: #{tpu_custom_call.1} parent=43 // pred_check
          %p361 = pneg %p116
        $region46: #{tpu_custom_call.1} parent=43 // pred_check_branch
          %363 = sbr.rel (%p361) target = $region48
        $region47: #{tpu_custom_call.1} parent=43 // pred_region
          %s364 = sand.u32 %s101, 1
          %s365 = scalar_lea.sflag [#allocation4], %s364
          %s366 = sand.u32 %s101, 1
          %s367 = scalar_lea.vmem [#allocation7], %s366
          %368 = dma.done %s365, 16
        $region48: #{tpu_custom_call.1} parent=43 // pred_fallthru
          _
      $region44: #{tpu_custom_call.1} parent=5 // pred_fallthru
        _
    $region6: #{tpu_custom_call.1} parent=1 // loop_footer
      %s21 = sadd.s32 1, %s17
    $region7: #{tpu_custom_call.1} parent=1 // loop_footer_branch
      %16 = sbr.rel target = $region3
    $region8: #{tpu_custom_call.1} parent=1 // loop_exit
      _
    %369 = vsyncpa [#allocation3], 1
    %s370 = scalar_lea.sflag [#allocation3], 1
    %371 = vsyncpa %s370, 1
    %372 = vsyncpa [#allocation6], 1
    %s373 = scalar_lea.sflag [#allocation6], 1
    %374 = vsyncpa %s373, 1
    %375 = vsyncpa [#allocation4], 1
    %s376 = scalar_lea.sflag [#allocation4], 1
    %377 = vsyncpa %s376, 1

</llo_original>
